<compile_context>
chip_gen: v7x
topology: tpu7x:2x2x1
jax: 0.10.0
libtpu: 0.0.40
codegen_flags: <defaults>
</compile_context>

<pallas_src>
import functools

import jax
import jax.numpy as jnp
from jax.experimental import pallas as pl
from jax.experimental.pallas import tpu as pltpu


def _round_up(x: int, m: int) -> int:
    return ((x + m - 1) // m) * m


def compose_head_mlp_kernel(left_ref, right_ref, wh_ref, w0_ref, w1_ref,
                            b0_ref, b1_ref, h_ref):
    left = left_ref[...].astype(jnp.float32)
    right = right_ref[...].astype(jnp.float32)

    # Bilinear gate: ba[b] = left[b] @ W_H @ right[b]   (MXU + VPU/XLU reduce)
    bm = jnp.dot(left_ref[...], wh_ref[...], preferred_element_type=jnp.float32)
    ba = jnp.sum(bm * right, axis=-1, keepdims=True)          # (TB, 1)

    # Gated mix (note: reference applies NO sigmoid to ba).
    input_h = ba * left + (1.0 - ba) * right                   # (TB, size)

    # Two-layer MLP with ReLU, biases broadcast from (1, size).
    h0 = jnp.maximum(
        jnp.dot(input_h, w0_ref[...], preferred_element_type=jnp.float32)
        + b0_ref[...], 0.0)
    h1 = jnp.maximum(
        jnp.dot(h0, w1_ref[...], preferred_element_type=jnp.float32)
        + b1_ref[...], 0.0)

    h_ref[...] = h1.astype(h_ref.dtype)


@functools.partial(jax.jit, static_argnames=("tb",))
def compose_head_mlp(left: jax.Array, right: jax.Array,
                     W_H: jax.Array, W_0: jax.Array, W_1: jax.Array,
                     B0: jax.Array, B1: jax.Array, *, tb: int = 128):
    B, size = left.shape
    assert right.shape == (B, size)
    assert W_H.shape == (size, size)
    assert W_0.shape == (size, size)
    assert W_1.shape == (size, size)
    assert B0.shape == (size,)
    assert B1.shape == (size,)

    # Batch tile: multiple of 8 sublanes, at most `tb`; pad B to a multiple.
    TB = min(tb, _round_up(B, 8))
    Bp = _round_up(B, TB)
    if Bp != B:
        pad = ((0, Bp - B), (0, 0))
        left = jnp.pad(left, pad)
        right = jnp.pad(right, pad)

    b0 = B0.reshape(1, size)
    b1 = B1.reshape(1, size)

    # Conservative VMEM budget: weights + vectors double-buffered, f32.
    est = 4 * (2 * 3 * size * size        # W_H, W_0, W_1 (2 buffers each)
               + 2 * 3 * TB * size        # left, right, h (2 buffers each)
               + 2 * 2 * size)            # biases
    vmem_limit = int(min(64 * 1024 * 1024, max(2 * est, 16 * 1024 * 1024)))

    vec_spec = pl.BlockSpec((TB, size), lambda i: (i, 0))
    mat_spec = pl.BlockSpec((size, size), lambda i: (0, 0))
    bias_spec = pl.BlockSpec((1, size), lambda i: (0, 0))

    h = pl.pallas_call(
        compose_head_mlp_kernel,
        out_shape=jax.ShapeDtypeStruct((Bp, size), jnp.float32),
        grid_spec=pltpu.PrefetchScalarGridSpec(
            num_scalar_prefetch=0,
            grid=(Bp // TB,),
            in_specs=[vec_spec, vec_spec,          # left, right
                      mat_spec, mat_spec, mat_spec,  # W_H, W_0, W_1
                      bias_spec, bias_spec],         # B, B_1
            out_specs=vec_spec,                      # h
        ),
        compiler_params=pltpu.CompilerParams(
            dimension_semantics=("parallel",),
            vmem_limit_bytes=vmem_limit),
    )(left, right, W_H, W_0, W_1, b0, b1)

    h = h[:B]
    c = jnp.zeros_like(h)
    return h, c


if __name__ == "__main__":
    B, size = 8, 32

    key = jax.random.PRNGKey(0)
    k1, k2, k3, k4, k5, k6, k7 = jax.random.split(key, 7)

    # Deterministic parameter init (mimics param.data.normal_()).
    W_H = jax.random.normal(k3, (size, size), dtype=jnp.float32)
    W_0 = jax.random.normal(k4, (size, size), dtype=jnp.float32)
    W_1 = jax.random.normal(k5, (size, size), dtype=jnp.float32)
    B0 = jax.random.normal(k6, (size,), dtype=jnp.float32)
    B1 = jax.random.normal(k7, (size,), dtype=jnp.float32)

    left = jax.random.normal(k1, (B, size), dtype=jnp.float32)
    right = jax.random.normal(k2, (B, size), dtype=jnp.float32)

    h, c = compose_head_mlp(left, right, W_H, W_0, W_1, B0, B1)
    h, c = jax.block_until_ready((h, c))

    # Reference (same math as the PyTorch forward).
    ba = jnp.einsum("bi,ij,bj->b", left, W_H, right)[:, None]
    input_h = ba * left + (1.0 - ba) * right
    h_ref = jnp.maximum(input_h @ W_0 + B0[None, :], 0.0)
    h_ref = jnp.maximum(h_ref @ W_1 + B1[None, :], 0.0)
    c_ref = jnp.zeros_like(h_ref)

    assert h.shape == (B, size) and c.shape == (B, size)
    assert jnp.allclose(h, h_ref, atol=1e-3, rtol=1e-3)
    assert jnp.allclose(c, c_ref)

    print("KERNEL_OK")
</pallas_src>

<mosaic_0001>
module attributes {stable_mosaic.version = 11 : i64} {
  func.func @compose_head_mlp_kernel(%arg0: i32, %arg1: memref<8x32xf32, #tpu.memory_space<vmem>>, %arg2: memref<8x32xf32, #tpu.memory_space<vmem>>, %arg3: memref<32x32xf32, #tpu.memory_space<vmem>>, %arg4: memref<32x32xf32, #tpu.memory_space<vmem>>, %arg5: memref<32x32xf32, #tpu.memory_space<vmem>>, %arg6: memref<1x32xf32, #tpu.memory_space<vmem>>, %arg7: memref<1x32xf32, #tpu.memory_space<vmem>>, %arg8: memref<8x32xf32, #tpu.memory_space<vmem>>) attributes {dimension_semantics = [#tpu.dimension_semantics<parallel>], iteration_bounds = array<i64: 1>, scalar_prefetch = 0 : i64, scratch_operands = 0 : i64, tpu.core_type = #tpu.core_type<tc>, window_params = [{transform_indices = @transform_0, window_bounds = array<i64: 8, 32>}, {transform_indices = @transform_1, window_bounds = array<i64: 8, 32>}, {pipeline_mode = #tpu.pipeline_mode<synchronous>, transform_indices = @transform_2, window_bounds = array<i64: 32, 32>}, {pipeline_mode = #tpu.pipeline_mode<synchronous>, transform_indices = @transform_3, window_bounds = array<i64: 32, 32>}, {pipeline_mode = #tpu.pipeline_mode<synchronous>, transform_indices = @transform_4, window_bounds = array<i64: 32, 32>}, {pipeline_mode = #tpu.pipeline_mode<synchronous>, transform_indices = @transform_5, window_bounds = array<i64: 1, 32>}, {pipeline_mode = #tpu.pipeline_mode<synchronous>, transform_indices = @transform_6, window_bounds = array<i64: 1, 32>}, {transform_indices = @transform_7, window_bounds = array<i64: 8, 32>}]} {
    %c0 = arith.constant 0 : index
    %c0_0 = arith.constant 0 : index
    %0 = vector.load %arg1[%c0, %c0_0] : memref<8x32xf32, #tpu.memory_space<vmem>>, vector<8x32xf32>
    %c0_1 = arith.constant 0 : index
    %c0_2 = arith.constant 0 : index
    %1 = vector.load %arg2[%c0_1, %c0_2] : memref<8x32xf32, #tpu.memory_space<vmem>>, vector<8x32xf32>
    %c0_3 = arith.constant 0 : index
    %c0_4 = arith.constant 0 : index
    %2 = vector.load %arg1[%c0_3, %c0_4] : memref<8x32xf32, #tpu.memory_space<vmem>>, vector<8x32xf32>
    %c0_5 = arith.constant 0 : index
    %c0_6 = arith.constant 0 : index
    %3 = vector.load %arg3[%c0_5, %c0_6] : memref<32x32xf32, #tpu.memory_space<vmem>>, vector<32x32xf32>
    %cst = arith.constant dense<0.000000e+00> : vector<8x32xf32>
    %4 = tpu.matmul %2, %3, %cst {dimension_numbers = #tpu.dot_dimension_numbers<[1], [0], [0], [1], [0, 0, 1, 1], [], []>} : vector<8x32xf32>, vector<32x32xf32>, vector<8x32xf32> -> vector<8x32xf32>
    %5 = arith.mulf %4, %1 : vector<8x32xf32>
    %cst_7 = arith.constant dense<0.000000e+00> : vector<8xf32>
    %6 = vector.multi_reduction <add>, %5, %cst_7 [1] : vector<8x32xf32> to vector<8xf32>
    %7 = vector.shape_cast %6 : vector<8xf32> to vector<8x1xf32>
    %8 = vector.broadcast %7 : vector<8x1xf32> to vector<8x32xf32>
    %9 = arith.mulf %8, %0 : vector<8x32xf32>
    %cst_8 = arith.constant 1.000000e+00 : f32
    %10 = vector.broadcast %cst_8 : f32 to vector<8x1xf32>
    %11 = arith.subf %10, %7 : vector<8x1xf32>
    %12 = vector.broadcast %11 : vector<8x1xf32> to vector<8x32xf32>
    %13 = arith.mulf %12, %1 : vector<8x32xf32>
    %14 = arith.addf %9, %13 : vector<8x32xf32>
    %c0_9 = arith.constant 0 : index
    %c0_10 = arith.constant 0 : index
    %15 = vector.load %arg4[%c0_9, %c0_10] : memref<32x32xf32, #tpu.memory_space<vmem>>, vector<32x32xf32>
    %cst_11 = arith.constant dense<0.000000e+00> : vector<8x32xf32>
    %16 = tpu.matmul %14, %15, %cst_11 {dimension_numbers = #tpu.dot_dimension_numbers<[1], [0], [0], [1], [0, 0, 1, 1], [], []>} : vector<8x32xf32>, vector<32x32xf32>, vector<8x32xf32> -> vector<8x32xf32>
    %c0_12 = arith.constant 0 : index
    %c0_13 = arith.constant 0 : index
    %17 = vector.load %arg6[%c0_12, %c0_13] : memref<1x32xf32, #tpu.memory_space<vmem>>, vector<1x32xf32>
    %18 = vector.broadcast %17 : vector<1x32xf32> to vector<8x32xf32>
    %19 = arith.addf %16, %18 : vector<8x32xf32>
    %cst_14 = arith.constant 0.000000e+00 : f32
    %20 = vector.broadcast %cst_14 : f32 to vector<8x32xf32>
    %21 = arith.maximumf %19, %20 : vector<8x32xf32>
    %c0_15 = arith.constant 0 : index
    %c0_16 = arith.constant 0 : index
    %22 = vector.load %arg5[%c0_15, %c0_16] : memref<32x32xf32, #tpu.memory_space<vmem>>, vector<32x32xf32>
    %cst_17 = arith.constant dense<0.000000e+00> : vector<8x32xf32>
    %23 = tpu.matmul %21, %22, %cst_17 {dimension_numbers = #tpu.dot_dimension_numbers<[1], [0], [0], [1], [0, 0, 1, 1], [], []>} : vector<8x32xf32>, vector<32x32xf32>, vector<8x32xf32> -> vector<8x32xf32>
    %c0_18 = arith.constant 0 : index
    %c0_19 = arith.constant 0 : index
    %24 = vector.load %arg7[%c0_18, %c0_19] : memref<1x32xf32, #tpu.memory_space<vmem>>, vector<1x32xf32>
    %25 = vector.broadcast %24 : vector<1x32xf32> to vector<8x32xf32>
    %26 = arith.addf %23, %25 : vector<8x32xf32>
    %cst_20 = arith.constant 0.000000e+00 : f32
    %27 = vector.broadcast %cst_20 : f32 to vector<8x32xf32>
    %28 = arith.maximumf %26, %27 : vector<8x32xf32>
    %c0_21 = arith.constant 0 : index
    %c0_22 = arith.constant 0 : index
    %29 = vector.load %arg8[%c0_21, %c0_22] : memref<8x32xf32, #tpu.memory_space<vmem>>, vector<8x32xf32>
    tpu.vector_store %arg8[%c0_21, %c0_22], %28 {strides = array<i32>} : memref<8x32xf32, #tpu.memory_space<vmem>>, vector<8x32xf32>,
    return
  }
  func.func @transform_0(%arg0: i32) -> (i32, i32) {
    %c0_i32 = arith.constant 0 : i32
    %c0_i32_0 = arith.constant 0 : i32
    return %arg0, %c0_i32 : i32, i32
  }
  func.func @transform_1(%arg0: i32) -> (i32, i32) {
    %c0_i32 = arith.constant 0 : i32
    %c0_i32_0 = arith.constant 0 : i32
    return %arg0, %c0_i32 : i32, i32
  }
  func.func @transform_2(%arg0: i32) -> (i32, i32) {
    %c0_i32 = arith.constant 0 : i32
    %c0_i32_0 = arith.constant 0 : i32
    %c0_i32_1 = arith.constant 0 : i32
    return %c0_i32, %c0_i32_0 : i32, i32
  }
  func.func @transform_3(%arg0: i32) -> (i32, i32) {
    %c0_i32 = arith.constant 0 : i32
    %c0_i32_0 = arith.constant 0 : i32
    %c0_i32_1 = arith.constant 0 : i32
    return %c0_i32, %c0_i32_0 : i32, i32
  }
  func.func @transform_4(%arg0: i32) -> (i32, i32) {
    %c0_i32 = arith.constant 0 : i32
    %c0_i32_0 = arith.constant 0 : i32
    %c0_i32_1 = arith.constant 0 : i32
    return %c0_i32, %c0_i32_0 : i32, i32
  }
  func.func @transform_5(%arg0: i32) -> (i32, i32) {
    %c0_i32 = arith.constant 0 : i32
    %c0_i32_0 = arith.constant 0 : i32
    %c0_i32_1 = arith.constant 0 : i32
    return %c0_i32, %c0_i32_0 : i32, i32
  }
  func.func @transform_6(%arg0: i32) -> (i32, i32) {
    %c0_i32 = arith.constant 0 : i32
    %c0_i32_0 = arith.constant 0 : i32
    %c0_i32_1 = arith.constant 0 : i32
    return %c0_i32, %c0_i32_0 : i32, i32
  }
  func.func @transform_7(%arg0: i32) -> (i32, i32) {
    %c0_i32 = arith.constant 0 : i32
    %c0_i32_0 = arith.constant 0 : i32
    return %arg0, %c0_i32 : i32, i32
  }
}

</mosaic_0001>

<llo_original>
// kernel: compose_head_mlp.1
$region0: #{compose_head_mlp.1}
  #allocation0 [shape = 'u32[]', space=smem, size = 0x4, offset = 0x4, fixed_abs, tag = 'smem constant byte address 0x4 - core index']
  #allocation1 [shape = 'u32[144,128]{1,0:T(1,128)}', space=vmem, size = 0x12000, scoped, tag = 'internal scratch']
  %s0 = inlined_call_operand.hbm [shape: f32[8,32], index: 0, kind: input, shape index: {}]
  %s1 = inlined_call_operand.vmem [shape: f32[8,32], index: 1, kind: input, shape index: {}]
  %s2 = inlined_call_operand.hbm [shape: f32[32,32], index: 2, kind: input, shape index: {}]
  %s3 = inlined_call_operand.hbm [shape: f32[32,32], index: 3, kind: input, shape index: {}]
  %s4 = inlined_call_operand.hbm [shape: f32[32,32], index: 4, kind: input, shape index: {}]
  %s5 = inlined_call_operand.vmem [shape: f32[1,32], index: 5, kind: input, shape index: {}]
  %s6 = inlined_call_operand.vmem [shape: f32[1,32], index: 6, kind: input, shape index: {}]
  %s7 = inlined_call_operand.hbm [shape: f32[8,32], index: 7, kind: output, shape index: {}]
  %s8 = sld [smem:[#allocation0]]
  $region54: #{compose_head_mlp.1} parent=0
    _
  %s10 = ssub.s32 1, %s8
  %s11 = scalar_select 0, %s10, %s8
  $region1: #{compose_head_mlp.1} parent=0
    #allocation2 [shape = 'u8[4096]{0}', space=vmem, size = 0x1000, scoped, tag = 'input window, operand 0, single buffered']
    #allocation3 [shape = 's32[1]{0}', space=sflag, size = 0x4, scoped, tag = 'scoped memory for compose_head_mlp.1']
    #allocation4 [shape = 's32[1]{0}', space=sflag, size = 0x4, scoped, tag = 'scoped memory for compose_head_mlp.1']
    #allocation5 [shape = 'u8[16384]{0}', space=vmem, size = 0x4000, scoped, tag = 'input window, operand 2, single buffered']
    #allocation6 [shape = 's32[1]{0}', space=sflag, size = 0x4, scoped, tag = 'scoped memory for compose_head_mlp.1']
    #allocation7 [shape = 'u8[16384]{0}', space=vmem, size = 0x4000, scoped, tag = 'input window, operand 3, single buffered']
    #allocation8 [shape = 'u8[16384]{0}', space=vmem, size = 0x4000, scoped, tag = 'input window, operand 4, single buffered']
    #allocation9 [shape = 's32[1]{0}', space=sflag, size = 0x4, scoped, tag = 'scoped memory for compose_head_mlp.1']
    #allocation10 [shape = 'u8[4096]{0}', space=vmem, size = 0x1000, scoped, tag = 'output window, operand 0, single buffered']
    %12 = vsyncpa [#allocation3], 0
    %13 = vsyncpa [#allocation6], 0
    %14 = vsyncpa [#allocation9], 0
    %15 = vsyncpa [#allocation4], 0
    // Predicated region
    $region2: #{compose_head_mlp.1} parent=1 // pred_check
      _
    $region3: #{compose_head_mlp.1} parent=1 // pred_check_branch
      %17 = sbr.rel (0) target = $region5
    $region4: #{compose_head_mlp.1} parent=1 // pred_region
      %s19 = ssub.s32 128, 128
      %20 = vsyncadd [#allocation3], %s19
      %s22 = sshll.u32 [#allocation2], 4
      %s23 = int_to_ptr.vmem [resolvable:$true] %s22
      %25 = dma.hbm_to_vmem [thread:$0]  %s0, 128, %s23, [#allocation3]
    $region5: #{compose_head_mlp.1} parent=1 // pred_fallthru
      _
    // Predicated region
    $region6: #{compose_head_mlp.1} parent=1 // pred_check
      _
    $region7: #{compose_head_mlp.1} parent=1 // pred_check_branch
      %27 = sbr.rel (0) target = $region9
    $region8: #{compose_head_mlp.1} parent=1 // pred_region
      _
    $region9: #{compose_head_mlp.1} parent=1 // pred_fallthru
      _
    // Predicated region
    $region10: #{compose_head_mlp.1} parent=1 // pred_check
      _
    $region11: #{compose_head_mlp.1} parent=1 // pred_check_branch
      %29 = sbr.rel (0) target = $region13
    $region12: #{compose_head_mlp.1} parent=1 // pred_region
      %s31 = ssub.s32 512, 512
      %32 = vsyncadd [#allocation6], %s31
      %s33 = sshll.u32 [#allocation5], 4
      %s34 = int_to_ptr.vmem [resolvable:$true] %s33
      %39 = dma.hbm_to_vmem [thread:$0]  %s2, 512, %s34, [#allocation6], 128, 128, 8
    $region13: #{compose_head_mlp.1} parent=1 // pred_fallthru
      _
    // Predicated region
    $region14: #{compose_head_mlp.1} parent=1 // pred_check
      _
    $region15: #{compose_head_mlp.1} parent=1 // pred_check_branch
      %41 = sbr.rel (0) target = $region17
    $region16: #{compose_head_mlp.1} parent=1 // pred_region
      %s43 = ssub.s32 512, 512
      %44 = vsyncadd [#allocation6], %s43
      %s45 = sshll.u32 [#allocation7], 4
      %s46 = int_to_ptr.vmem [resolvable:$true] %s45
      %51 = dma.hbm_to_vmem [thread:$0]  %s3, 512, %s46, [#allocation6], 128, 128, 8
    $region17: #{compose_head_mlp.1} parent=1 // pred_fallthru
      _
    // Predicated region
    $region18: #{compose_head_mlp.1} parent=1 // pred_check
      _
    $region19: #{compose_head_mlp.1} parent=1 // pred_check_branch
      %53 = sbr.rel (0) target = $region21
    $region20: #{compose_head_mlp.1} parent=1 // pred_region
      %s55 = ssub.s32 512, 512
      %56 = vsyncadd [#allocation9], %s55
      %s57 = sshll.u32 [#allocation8], 4
      %s58 = int_to_ptr.vmem [resolvable:$true] %s57
      %63 = dma.hbm_to_vmem [thread:$0]  %s4, 512, %s58, [#allocation9], 128, 128, 8
    $region21: #{compose_head_mlp.1} parent=1 // pred_fallthru
      _
    // Predicated region
    $region22: #{compose_head_mlp.1} parent=1 // pred_check
      _
    $region23: #{compose_head_mlp.1} parent=1 // pred_check_branch
      %65 = sbr.rel (0) target = $region25
    $region24: #{compose_head_mlp.1} parent=1 // pred_region
      _
    $region25: #{compose_head_mlp.1} parent=1 // pred_fallthru
      _
    // Predicated region
    $region26: #{compose_head_mlp.1} parent=1 // pred_check
      _
    $region27: #{compose_head_mlp.1} parent=1 // pred_check_branch
      %67 = sbr.rel (0) target = $region29
    $region28: #{compose_head_mlp.1} parent=1 // pred_region
      _
    $region29: #{compose_head_mlp.1} parent=1 // pred_fallthru
      _
    // Predicated region
    $region30: #{compose_head_mlp.1} parent=1 // pred_check
      _
    $region31: #{compose_head_mlp.1} parent=1 // pred_check_branch
      %69 = sbr.rel (0) target = $region33
    $region32: #{compose_head_mlp.1} parent=1 // pred_region
      %70 = dma.done [#allocation3], 128
    $region33: #{compose_head_mlp.1} parent=1 // pred_fallthru
      _
    // Predicated region
    $region34: #{compose_head_mlp.1} parent=1 // pred_check
      _
    $region35: #{compose_head_mlp.1} parent=1 // pred_check_branch
      %72 = sbr.rel (0) target = $region37
    $region36: #{compose_head_mlp.1} parent=1 // pred_region
      %73 = dma.done [#allocation6], 512
    $region37: #{compose_head_mlp.1} parent=1 // pred_fallthru
      _
    // Predicated region
    $region38: #{compose_head_mlp.1} parent=1 // pred_check
      _
    $region39: #{compose_head_mlp.1} parent=1 // pred_check_branch
      %75 = sbr.rel (0) target = $region41
    $region40: #{compose_head_mlp.1} parent=1 // pred_region
      %76 = dma.done [#allocation6], 512
    $region41: #{compose_head_mlp.1} parent=1 // pred_fallthru
      _
    // Predicated region
    $region42: #{compose_head_mlp.1} parent=1 // pred_check
      _
    $region43: #{compose_head_mlp.1} parent=1 // pred_check_branch
      %78 = sbr.rel (0) target = $region45
    $region44: #{compose_head_mlp.1} parent=1 // pred_region
      %79 = dma.done [#allocation9], 512
    $region45: #{compose_head_mlp.1} parent=1 // pred_fallthru
      _
    %v80 = vld [vmem:[#allocation2] sm:$0xff]
    %v81 = vld [vmem:[%s1] sm:$0xff]
    %v82 = vld [vmem:[#allocation5] sm:$0xff]
    %v83 = vld [vmem:[#allocation5 + $0x8] sm:$0xff]
    %v84 = vld [vmem:[#allocation5 + $0x10] sm:$0xff]
    %v85 = vld [vmem:[#allocation5 + $0x18] sm:$0xff]
    %vm86 = vcmask 261120
    %v88 = vsel %vm86, %v80, 0
    %90 = vmatprep.subr.mxu0 0.0
    %91 = vmatpush1.msra.mxu0 %v82
    %92 = vmatprep.subr.mxu0 0.0
    %93 = vmatpush1.msra.mxu0 %v83
    %94 = vmatprep.subr.mxu0 0.0
    %95 = vmatpush1.msra.mxu0 %v84
    %96 = vmatprep.subr.mxu0 0.0
    %97 = vmatpush1.msra.mxu0 %v85
    %98 = vmatprep.subr.mxu0 0.0
    %99 = vmatpush1.msra.mxu0 0.0
    %100 = vmatprep.subr.mxu0 0.0
    %101 = vmatpush1.msra.mxu0 0.0
    %102 = vmatprep.subr.mxu0 0.0
    %103 = vmatpush1.msra.mxu0 0.0
    %104 = vmatprep.subr.mxu0 0.0
    %105 = vmatpush1.msra.mxu0 0.0
    %106 = vmatprep.subr.mxu0 0.0
    %107 = vmatpush1.msra.mxu0 0.0
    %108 = vmatprep.subr.mxu0 0.0
    %109 = vmatpush1.msra.mxu0 0.0
    %110 = vmatprep.subr.mxu0 0.0
    %111 = vmatpush1.msra.mxu0 0.0
    %112 = vmatprep.subr.mxu0 0.0
    %113 = vmatpush1.msra.mxu0 0.0
    %114 = vmatprep.subr.mxu0 0.0
    %115 = vmatpush1.msra.mxu0 0.0
    %116 = vmatprep.subr.mxu0 0.0
    %117 = vmatpush1.msra.mxu0 0.0
    %118 = vmatprep.subr.mxu0 0.0
    %119 = vmatpush1.msra.mxu0 0.0
    %120 = vmatprep.subr.mxu0 0.0
    %121 = vmatpush1.msra.mxu0 0.0
    %122 = vmatprep.subr.mxu0 0.0
    %123 = vmatpush1.msra.mxu0 0.0
    %124 = vmatprep.subr.mxu0 0.0
    %125 = vmatpush1.msra.mxu0 0.0
    %126 = vmatprep.subr.mxu0 0.0
    %127 = vmatpush1.msra.mxu0 0.0
    %128 = vmatprep.subr.mxu0 0.0
    %129 = vmatpush1.msra.mxu0 0.0
    %130 = vmatprep.subr.mxu0 0.0
    %131 = vmatpush1.msra.mxu0 0.0
    %132 = vmatprep.subr.mxu0 0.0
    %133 = vmatpush1.msra.mxu0 0.0
    %134 = vmatprep.subr.mxu0 0.0
    %135 = vmatpush1.msra.mxu0 0.0
    %136 = vmatprep.subr.mxu0 0.0
    %137 = vmatpush1.msra.mxu0 0.0
    %138 = vmatprep.subr.mxu0 0.0
    %139 = vmatpush1.msra.mxu0 0.0
    %140 = vmatprep.subr.mxu0 0.0
    %141 = vmatpush1.msra.mxu0 0.0
    %142 = vmatprep.subr.mxu0 0.0
    %143 = vmatpush1.msra.mxu0 0.0
    %144 = vmatprep.subr.mxu0 0.0
    %145 = vmatpush1.msra.mxu0 0.0
    %146 = vmatprep.subr.mxu0 0.0
    %147 = vmatpush1.msra.mxu0 0.0
    %148 = vmatprep.subr.mxu0 0.0
    %149 = vmatpush1.msra.mxu0 0.0
    %150 = vmatprep.subr.mxu0 0.0
    %151 = vmatpush1.msra.mxu0 0.0
    %152 = vmatprep.subr.mxu0 0.0
    %153 = vmatpush1.msra.mxu0 0.0
    %154 = vmatprep.mubr.f32.mxu0 0.0
    %155 = vmatmul.mubr.f32.gmra.mrb[0].mxu0 %v88
    %v156 = vpop.f32.mrb[0].mxu0
    %v157 = vadd.f32 0.0, %v156
    %v158 = vpop.f32.mrb[0].mxu0
    %159 = vdwg.mxu0
    %v160 = vmul.f32 %v157, %v81
    %v161 = vsel %vm86, %v160, 0.0
    %162 = vadd.xlane.f32.xlu0 %v161
    %v163 = vpop.xlane.xlu0 %162
    %v164 = vmul.f32 %v163, %v80
    %v165 = vsub.f32 1.0, %v163
    %v166 = vmul.f32 %v165, %v81
    %v167 = vadd.f32 %v164, %v166
    %v168 = vld [vmem:[#allocation7] sm:$0xff]
    %v169 = vld [vmem:[#allocation7 + $0x8] sm:$0xff]
    %v170 = vld [vmem:[#allocation7 + $0x10] sm:$0xff]
    %v171 = vld [vmem:[#allocation7 + $0x18] sm:$0xff]
    %v172 = vld [vmem:[%s5] sm:$0x1]
    %v174 = vlaneseq
    %v175 = vshrl.u32 %v174, 7
    %v176 = vsub.s32 0, %v175
    %v177 = vrot.slane %v172, %v176
    %v180 = vsel %vm86, %v167, 0
    %182 = vmatprep.subr.mxu0 0.0
    %183 = vmatpush1.msra.mxu0 %v168
    %184 = vmatprep.subr.mxu0 0.0
    %185 = vmatpush1.msra.mxu0 %v169
    %186 = vmatprep.subr.mxu0 0.0
    %187 = vmatpush1.msra.mxu0 %v170
    %188 = vmatprep.subr.mxu0 0.0
    %189 = vmatpush1.msra.mxu0 %v171
    %190 = vmatprep.subr.mxu0 0.0
    %191 = vmatpush1.msra.mxu0 0.0
    %192 = vmatprep.subr.mxu0 0.0
    %193 = vmatpush1.msra.mxu0 0.0
    %194 = vmatprep.subr.mxu0 0.0
    %195 = vmatpush1.msra.mxu0 0.0
    %196 = vmatprep.subr.mxu0 0.0
    %197 = vmatpush1.msra.mxu0 0.0
    %198 = vmatprep.subr.mxu0 0.0
    %199 = vmatpush1.msra.mxu0 0.0
    %200 = vmatprep.subr.mxu0 0.0
    %201 = vmatpush1.msra.mxu0 0.0
    %202 = vmatprep.subr.mxu0 0.0
    %203 = vmatpush1.msra.mxu0 0.0
    %204 = vmatprep.subr.mxu0 0.0
    %205 = vmatpush1.msra.mxu0 0.0
    %206 = vmatprep.subr.mxu0 0.0
    %207 = vmatpush1.msra.mxu0 0.0
    %208 = vmatprep.subr.mxu0 0.0
    %209 = vmatpush1.msra.mxu0 0.0
    %210 = vmatprep.subr.mxu0 0.0
    %211 = vmatpush1.msra.mxu0 0.0
    %212 = vmatprep.subr.mxu0 0.0
    %213 = vmatpush1.msra.mxu0 0.0
    %214 = vmatprep.subr.mxu0 0.0
    %215 = vmatpush1.msra.mxu0 0.0
    %216 = vmatprep.subr.mxu0 0.0
    %217 = vmatpush1.msra.mxu0 0.0
    %218 = vmatprep.subr.mxu0 0.0
    %219 = vmatpush1.msra.mxu0 0.0
    %220 = vmatprep.subr.mxu0 0.0
    %221 = vmatpush1.msra.mxu0 0.0
    %222 = vmatprep.subr.mxu0 0.0
    %223 = vmatpush1.msra.mxu0 0.0
    %224 = vmatprep.subr.mxu0 0.0
    %225 = vmatpush1.msra.mxu0 0.0
    %226 = vmatprep.subr.mxu0 0.0
    %227 = vmatpush1.msra.mxu0 0.0
    %228 = vmatprep.subr.mxu0 0.0
    %229 = vmatpush1.msra.mxu0 0.0
    %230 = vmatprep.subr.mxu0 0.0
    %231 = vmatpush1.msra.mxu0 0.0
    %232 = vmatprep.subr.mxu0 0.0
    %233 = vmatpush1.msra.mxu0 0.0
    %234 = vmatprep.subr.mxu0 0.0
    %235 = vmatpush1.msra.mxu0 0.0
    %236 = vmatprep.subr.mxu0 0.0
    %237 = vmatpush1.msra.mxu0 0.0
    %238 = vmatprep.subr.mxu0 0.0
    %239 = vmatpush1.msra.mxu0 0.0
    %240 = vmatprep.subr.mxu0 0.0
    %241 = vmatpush1.msra.mxu0 0.0
    %242 = vmatprep.subr.mxu0 0.0
    %243 = vmatpush1.msra.mxu0 0.0
    %244 = vmatprep.subr.mxu0 0.0
    %245 = vmatpush1.msra.mxu0 0.0
    %246 = vmatprep.mubr.f32.mxu0 0.0
    %247 = vmatmul.mubr.f32.gmra.mrb[0].mxu0 %v180
    %v248 = vpop.f32.mrb[0].mxu0
    %v249 = vadd.f32 %v177, %v248
    %v250 = vpop.f32.mrb[0].mxu0
    %251 = vdwg.mxu0
    %v252 = vmax.f32 %v249, 0.0
    %v253 = vld [vmem:[#allocation8] sm:$0xff]
    %v254 = vld [vmem:[#allocation8 + $0x8] sm:$0xff]
    %v255 = vld [vmem:[#allocation8 + $0x10] sm:$0xff]
    %v256 = vld [vmem:[#allocation8 + $0x18] sm:$0xff]
    %v257 = vld [vmem:[%s6] sm:$0x1]
    %v259 = vlaneseq
    %v260 = vshrl.u32 %v259, 7
    %v261 = vsub.s32 0, %v260
    %v262 = vrot.slane %v257, %v261
    %v265 = vsel %vm86, %v252, 0
    %267 = vmatprep.subr.mxu0 0.0
    %268 = vmatpush1.msra.mxu0 %v253
    %269 = vmatprep.subr.mxu0 0.0
    %270 = vmatpush1.msra.mxu0 %v254
    %271 = vmatprep.subr.mxu0 0.0
    %272 = vmatpush1.msra.mxu0 %v255
    %273 = vmatprep.subr.mxu0 0.0
    %274 = vmatpush1.msra.mxu0 %v256
    %275 = vmatprep.subr.mxu0 0.0
    %276 = vmatpush1.msra.mxu0 0.0
    %277 = vmatprep.subr.mxu0 0.0
    %278 = vmatpush1.msra.mxu0 0.0
    %279 = vmatprep.subr.mxu0 0.0
    %280 = vmatpush1.msra.mxu0 0.0
    %281 = vmatprep.subr.mxu0 0.0
    %282 = vmatpush1.msra.mxu0 0.0
    %283 = vmatprep.subr.mxu0 0.0
    %284 = vmatpush1.msra.mxu0 0.0
    %285 = vmatprep.subr.mxu0 0.0
    %286 = vmatpush1.msra.mxu0 0.0
    %287 = vmatprep.subr.mxu0 0.0
    %288 = vmatpush1.msra.mxu0 0.0
    %289 = vmatprep.subr.mxu0 0.0
    %290 = vmatpush1.msra.mxu0 0.0
    %291 = vmatprep.subr.mxu0 0.0
    %292 = vmatpush1.msra.mxu0 0.0
    %293 = vmatprep.subr.mxu0 0.0
    %294 = vmatpush1.msra.mxu0 0.0
    %295 = vmatprep.subr.mxu0 0.0
    %296 = vmatpush1.msra.mxu0 0.0
    %297 = vmatprep.subr.mxu0 0.0
    %298 = vmatpush1.msra.mxu0 0.0
    %299 = vmatprep.subr.mxu0 0.0
    %300 = vmatpush1.msra.mxu0 0.0
    %301 = vmatprep.subr.mxu0 0.0
    %302 = vmatpush1.msra.mxu0 0.0
    %303 = vmatprep.subr.mxu0 0.0
    %304 = vmatpush1.msra.mxu0 0.0
    %305 = vmatprep.subr.mxu0 0.0
    %306 = vmatpush1.msra.mxu0 0.0
    %307 = vmatprep.subr.mxu0 0.0
    %308 = vmatpush1.msra.mxu0 0.0
    %309 = vmatprep.subr.mxu0 0.0
    %310 = vmatpush1.msra.mxu0 0.0
    %311 = vmatprep.subr.mxu0 0.0
    %312 = vmatpush1.msra.mxu0 0.0
    %313 = vmatprep.subr.mxu0 0.0
    %314 = vmatpush1.msra.mxu0 0.0
    %315 = vmatprep.subr.mxu0 0.0
    %316 = vmatpush1.msra.mxu0 0.0
    %317 = vmatprep.subr.mxu0 0.0
    %318 = vmatpush1.msra.mxu0 0.0
    %319 = vmatprep.subr.mxu0 0.0
    %320 = vmatpush1.msra.mxu0 0.0
    %321 = vmatprep.subr.mxu0 0.0
    %322 = vmatpush1.msra.mxu0 0.0
    %323 = vmatprep.subr.mxu0 0.0
    %324 = vmatpush1.msra.mxu0 0.0
    %325 = vmatprep.subr.mxu0 0.0
    %326 = vmatpush1.msra.mxu0 0.0
    %327 = vmatprep.subr.mxu0 0.0
    %328 = vmatpush1.msra.mxu0 0.0
    %329 = vmatprep.subr.mxu0 0.0
    %330 = vmatpush1.msra.mxu0 0.0
    %331 = vmatprep.mubr.f32.mxu0 0.0
    %332 = vmatmul.mubr.f32.gmra.mrb[0].mxu0 %v265
    %v333 = vpop.f32.mrb[0].mxu0
    %v334 = vadd.f32 %v262, %v333
    %v335 = vpop.f32.mrb[0].mxu0
    %336 = vdwg.mxu0
    %v337 = vmax.f32 %v334, 0.0
    %338 = vst.msk [vmem:[#allocation10] sm:$0xff] %vm86, %v337
    // Predicated region
    $region46: #{compose_head_mlp.1} parent=1 // pred_check
      _
    $region47: #{compose_head_mlp.1} parent=1 // pred_check_branch
      %340 = sbr.rel (0) target = $region49
    $region48: #{compose_head_mlp.1} parent=1 // pred_region
      %s342 = ssub.s32 128, 128
      %343 = vsyncadd [#allocation4], %s342
      %s345 = sshll.u32 [#allocation10], 4
      %s346 = int_to_ptr.vmem [resolvable:$true] %s345
      %348 = dma.vmem_to_hbm [thread:$0]  %s346, 128, %s7, [#allocation4]
    $region49: #{compose_head_mlp.1} parent=1 // pred_fallthru
      _
    // Predicated region
    $region50: #{compose_head_mlp.1} parent=1 // pred_check
      _
    $region51: #{compose_head_mlp.1} parent=1 // pred_check_branch
      %350 = sbr.rel (0) target = $region53
    $region52: #{compose_head_mlp.1} parent=1 // pred_region
      %351 = dma.done [#allocation4], 128
    $region53: #{compose_head_mlp.1} parent=1 // pred_fallthru
      _
    %352 = vsyncpa [#allocation3], 1
    %353 = vsyncpa [#allocation6], 1
    %354 = vsyncpa [#allocation9], 1
    %355 = vsyncpa [#allocation4], 1

</llo_original>
